<compile_context>
chip_gen: v7x
topology: tpu7x:2x2x1
jax: 0.10.0
libtpu: 0.0.40
codegen_flags: <defaults>
</compile_context>

<pallas_src>
import jax
import jax.numpy as jnp
from jax import lax
from jax.experimental import pallas as pl
from jax.experimental.pallas import tpu as pltpu

_LANE = 128
_MIB = 1 << 20

# dimension_semantics values (string fallbacks keep older jax versions working).
_PARALLEL = getattr(pltpu, "PARALLEL", "parallel")
_ARBITRARY = getattr(pltpu, "ARBITRARY", "arbitrary")
_CORE_PARALLEL = getattr(pltpu, "CORE_PARALLEL", None)


def _round_up(v, m):
    return ((v + m - 1) // m) * m


def _linreg_kernel(x_ref, w_ref, o_ref, acc_ref):
    """One (row-tile, feature-tile) step of y = x @ w^T, with a lane-dense output row.

    x_ref:   (TILE_N, TILE_K)  tile of x rows
    w_ref:   (8, TILE_K)       the single weight row, replicated over 8 sublanes
    o_ref:   (1, TILE_N)       lane-dense output row for this row tile
    acc_ref: (8, TILE_N)       f32 accumulator, resident across the K (feature) grid axis
    """
    k = pl.program_id(1)

    @pl.when(k == 0)
    def _():
        acc_ref[...] = jnp.zeros_like(acc_ref)

    # (8, TILE_K) . (TILE_N, TILE_K)^T -> (8, TILE_N): results land on lanes (lane-dense),
    # so the store below is an unmasked full-width vst, not a masked column store.
    acc_ref[...] += lax.dot_general(
        w_ref[...],
        x_ref[...],
        dimension_numbers=(((1,), (1,)), ((), ())),
        preferred_element_type=jnp.float32,
    )

    @pl.when(k == pl.num_programs(1) - 1)
    def _():
        o_ref[...] = acc_ref[0:1, :].astype(o_ref.dtype)


def linear_regressor_forward(x, weight, *, max_rows_per_tile=None, max_cols_per_tile=None):
    """x: (N, F) float32; weight: (1, F) float32 (PyTorch nn.Linear layout) -> (N, 1)."""
    N, F = x.shape
    assert weight.shape == (1, F), f"expected weight (1, {F}), got {weight.shape}"

    # --- trace-time hardware query; fall back to the smallest physical VMEM (v7x: 64 MiB).
    try:
        vmem_phys = int(getattr(pltpu.get_tpu_info(), "vmem_capacity_bytes", 64 * _MIB))
    except Exception:
        vmem_phys = 64 * _MIB

    # Per-buffer x-tile budget: ~1/5 of physical VMEM, capped at 16 MiB.  Double-buffered
    # plus (w, out, acc, matmul scratch) headroom this stays < 48 MiB on v7x (64 MiB
    # physical) and well inside v5e/v6e's 128 MiB once vmem_limit_bytes is raised below.
    x_buf_budget = max(4 * _MIB, min(16 * _MIB, (vmem_phys // (5 * _MIB)) * _MIB))
    vmem_limit = max(48 * _MIB, min((vmem_phys * 3) // 4, 100 * _MIB))

    # --- K (feature) tiling: only for wide F, so TILE_N never collapses.
    k_split = 4096 if max_cols_per_tile is None else int(max_cols_per_tile)
    tile_k = F
    if F > k_split:
        for cand in (4096, 2048, 1024, 512, 256, 128):
            if cand <= k_split and F % cand == 0:
                tile_k = cand
                break
        # TODO(synk): very wide F that is not a multiple of 128 keeps a single K block;
        #   K-tiling such shapes needs masking of the K overhang (it is a contraction axis).
    lanes_k = _round_up(tile_k, _LANE)          # f32 VMEM lane padding of the minor dim

    # --- N (row) tiling, sized by bytes (VMEM footprint of the x tile), not rows.
    tile_n = max(_LANE, ((x_buf_budget // (lanes_k * 4)) // _LANE) * _LANE)
    tile_n = min(tile_n, _round_up(N, _LANE))   # do not tile past the data
    if max_rows_per_tile is not None:
        tile_n = min(tile_n, max(_LANE, _round_up(int(max_rows_per_tile), _LANE)))

    grid_n = pl.cdiv(N, tile_n)
    grid_k = pl.cdiv(F, tile_k)

    # The single weight row, replicated over 8 sublanes so every matmul operand is
    # (8,128)-aligned; row 0 of the accumulator is the actual result.
    w8 = jnp.broadcast_to(weight, (8, F))

    def _call(row_axis_semantics):
        return pl.pallas_call(
            _linreg_kernel,
            out_shape=jax.ShapeDtypeStruct((1, grid_n * tile_n), x.dtype),
            grid_spec=pltpu.PrefetchScalarGridSpec(
                num_scalar_prefetch=0,
                grid=(grid_n, grid_k),
                in_specs=[
                    # Ragged N: the last row tile is a partial block (no wrapper-side pad
                    # copy of x); its overhang rows only feed output lanes we slice off.
                    pl.BlockSpec((tile_n, tile_k), lambda i, k: (i, k)),
                    pl.BlockSpec((8, tile_k), lambda i, k: (0, k)),
                ],
                # Lane-dense output row per row tile; invariant over k (accumulated).
                out_specs=pl.BlockSpec((1, tile_n), lambda i, k: (0, i)),
                scratch_shapes=[pltpu.VMEM((8, tile_n), jnp.float32)],
            ),
            compiler_params=pltpu.CompilerParams(
                dimension_semantics=(row_axis_semantics, _ARBITRARY),
                vmem_limit_bytes=int(vmem_limit),
            ),
            cost_estimate=pl.CostEstimate(
                flops=2 * N * F,
                transcendentals=0,
                bytes_accessed=4 * (N * F + 8 * F + N),
            ),
        )(x, w8)

    if _CORE_PARALLEL is not None:
        try:
            # v7x: shard the independent row tiles across both TensorCores; harmless on
            # single-core v5e/v6e.  Fall back to plain "parallel" if it does not lower.
            y_rows = _call(_CORE_PARALLEL)
        except Exception:
            y_rows = _call(_PARALLEL)
    else:
        y_rows = _call(_PARALLEL)

    return y_rows[0, :N].reshape(N, 1)


if __name__ == "__main__":
    key = jax.random.PRNGKey(0)
    kx, kw, kx2, kx3, kw3 = jax.random.split(key, 5)

    # Small demo shape consistent with the module: batch=8, num_in_feats=32.
    num_in_feats = 32
    batch = 8
    bound = 1.0 / jnp.sqrt(jnp.float32(num_in_feats))
    weight = jax.random.uniform(
        kw, (1, num_in_feats), dtype=jnp.float32, minval=-bound, maxval=bound
    )
    x = jax.random.normal(kx, (batch, num_in_feats), dtype=jnp.float32)
    y_hat = jax.block_until_ready(linear_regressor_forward(x, weight))
    assert y_hat.shape == (batch, 1)
    assert jnp.allclose(y_hat, x @ weight.T, atol=1e-5, rtol=1e-5)

    # Multi-tile grid + ragged-N edge tile (no pad copy): force small row tiles.
    n_big = 4100
    x_big = jax.random.normal(kx2, (n_big, num_in_feats), dtype=jnp.float32)
    y_big = jax.block_until_ready(
        linear_regressor_forward(x_big, weight, max_rows_per_tile=1024)
    )
    assert y_big.shape == (n_big, 1)
    assert jnp.allclose(y_big, x_big @ weight.T, atol=1e-4, rtol=1e-4)

    # K-tiled (wide-feature) accumulator path, kept small by forcing tile_k=128.
    n3, f3 = 300, 256
    w3 = jax.random.uniform(kw3, (1, f3), dtype=jnp.float32, minval=-0.1, maxval=0.1)
    x3 = jax.random.normal(kx3, (n3, f3), dtype=jnp.float32)
    y3 = jax.block_until_ready(
        linear_regressor_forward(x3, w3, max_rows_per_tile=128, max_cols_per_tile=128)
    )
    assert y3.shape == (n3, 1)
    assert jnp.allclose(y3, x3 @ w3.T, atol=1e-4, rtol=1e-4)

    print("KERNEL_OK")
</pallas_src>

<mosaic_0001>
module attributes {stable_mosaic.version = 11 : i64} {
  func.func @_linreg_kernel(%arg0: i32, %arg1: i32, %arg2: memref<128x32xf32, #tpu.memory_space<vmem>>, %arg3: memref<8x32xf32, #tpu.memory_space<vmem>>, %arg4: memref<1x128xf32, #tpu.memory_space<vmem>>, %arg5: memref<8x128xf32, #tpu.memory_space<vmem>>) attributes {dimension_semantics = [#tpu.dimension_semantics<core_parallel>, #tpu.dimension_semantics<arbitrary>], iteration_bounds = array<i64: 1, 1>, scalar_prefetch = 0 : i64, scratch_operands = 1 : i64, tpu.core_type = #tpu.core_type<tc>, window_params = [{transform_indices = @transform_0, window_bounds = array<i64: 128, 32>}, {transform_indices = @transform_1, window_bounds = array<i64: 8, 32>}, {transform_indices = @transform_2, window_bounds = array<i64: 1, 128>}]} {
    %c0_i32 = arith.constant 0 : i32
    %0 = arith.cmpi eq, %arg1, %c0_i32 : i32
    %1 = arith.extui %0 : i1 to i32
    %c0_i32_0 = arith.constant 0 : i32
    %2 = arith.cmpi ne, %1, %c0_i32_0 : i32
    scf.if %2 {
      %cst_10 = arith.constant 0.000000e+00 : f32
      %12 = vector.broadcast %cst_10 : f32 to vector<8x128xf32>
      %c0_11 = arith.constant 0 : index
      %c0_12 = arith.constant 0 : index
      %13 = vector.load %arg5[%c0_11, %c0_12] : memref<8x128xf32, #tpu.memory_space<vmem>>, vector<8x128xf32>
      tpu.vector_store %arg5[%c0_11, %c0_12], %12 {strides = array<i32>} : memref<8x128xf32, #tpu.memory_space<vmem>>, vector<8x128xf32>,
    } else {
    }
    %c0 = arith.constant 0 : index
    %c0_1 = arith.constant 0 : index
    %3 = vector.load %arg5[%c0, %c0_1] : memref<8x128xf32, #tpu.memory_space<vmem>>, vector<8x128xf32>
    %c0_2 = arith.constant 0 : index
    %c0_3 = arith.constant 0 : index
    %4 = vector.load %arg3[%c0_2, %c0_3] : memref<8x32xf32, #tpu.memory_space<vmem>>, vector<8x32xf32>
    %c0_4 = arith.constant 0 : index
    %c0_5 = arith.constant 0 : index
    %5 = vector.load %arg2[%c0_4, %c0_5] : memref<128x32xf32, #tpu.memory_space<vmem>>, vector<128x32xf32>
    %cst = arith.constant dense<0.000000e+00> : vector<8x128xf32>
    %6 = tpu.matmul %4, %5, %cst {dimension_numbers = #tpu.dot_dimension_numbers<[1], [1], [0], [0], [0, 0, 1, 0], [], []>} : vector<8x32xf32>, vector<128x32xf32>, vector<8x128xf32> -> vector<8x128xf32>
    %7 = arith.addf %3, %6 : vector<8x128xf32>
    %c0_6 = arith.constant 0 : index
    %c0_7 = arith.constant 0 : index
    %8 = vector.load %arg5[%c0_6, %c0_7] : memref<8x128xf32, #tpu.memory_space<vmem>>, vector<8x128xf32>
    tpu.vector_store %arg5[%c0_6, %c0_7], %7 {strides = array<i32>} : memref<8x128xf32, #tpu.memory_space<vmem>>, vector<8x128xf32>,
    %c0_i32_8 = arith.constant 0 : i32
    %9 = arith.cmpi eq, %arg1, %c0_i32_8 : i32
    %10 = arith.extui %9 : i1 to i32
    %c0_i32_9 = arith.constant 0 : i32
    %11 = arith.cmpi ne, %10, %c0_i32_9 : i32
    scf.if %11 {
      %c0_10 = arith.constant 0 : index
      %c0_11 = arith.constant 0 : index
      %12 = vector.load %arg5[%c0_10, %c0_11] : memref<8x128xf32, #tpu.memory_space<vmem>>, vector<1x128xf32>
      %c0_12 = arith.constant 0 : index
      %c0_13 = arith.constant 0 : index
      %13 = vector.load %arg4[%c0_12, %c0_13] : memref<1x128xf32, #tpu.memory_space<vmem>>, vector<1x128xf32>
      tpu.vector_store %arg4[%c0_12, %c0_13], %12 {strides = array<i32>} : memref<1x128xf32, #tpu.memory_space<vmem>>, vector<1x128xf32>,
    } else {
    }
    return
  }
  func.func @transform_0(%arg0: i32, %arg1: i32) -> (i32, i32) {
    %c0_i32 = arith.constant 0 : i32
    return %arg0, %arg1 : i32, i32
  }
  func.func @transform_1(%arg0: i32, %arg1: i32) -> (i32, i32) {
    %c0_i32 = arith.constant 0 : i32
    %c0_i32_0 = arith.constant 0 : i32
    return %c0_i32, %arg1 : i32, i32
  }
  func.func @transform_2(%arg0: i32, %arg1: i32) -> (i32, i32) {
    %c0_i32 = arith.constant 0 : i32
    %c0_i32_0 = arith.constant 0 : i32
    return %c0_i32, %arg0 : i32, i32
  }
}

module attributes {stable_mosaic.version = 11 : i64} {
  func.func @_linreg_kernel(%arg0: i32, %arg1: i32, %arg2: memref<128x32xf32, #tpu.memory_space<vmem>>, %arg3: memref<8x32xf32, #tpu.memory_space<vmem>>, %arg4: memref<1x128xf32, #tpu.memory_space<vmem>>, %arg5: memref<8x128xf32, #tpu.memory_space<vmem>>) attributes {dimension_semantics = [#tpu.dimension_semantics<parallel>, #tpu.dimension_semantics<arbitrary>], iteration_bounds = array<i64: 1, 1>, scalar_prefetch = 0 : i64, scratch_operands = 1 : i64, tpu.core_type = #tpu.core_type<tc>, window_params = [{transform_indices = @transform_0, window_bounds = array<i64: 128, 32>}, {transform_indices = @transform_1, window_bounds = array<i64: 8, 32>}, {transform_indices = @transform_2, window_bounds = array<i64: 1, 128>}]} {
    %c0_i32 = arith.constant 0 : i32
    %0 = arith.cmpi eq, %arg1, %c0_i32 : i32
    %1 = arith.extui %0 : i1 to i32
    %c0_i32_0 = arith.constant 0 : i32
    %2 = arith.cmpi ne, %1, %c0_i32_0 : i32
    scf.if %2 {
      %cst_10 = arith.constant 0.000000e+00 : f32
      %12 = vector.broadcast %cst_10 : f32 to vector<8x128xf32>
      %c0_11 = arith.constant 0 : index
      %c0_12 = arith.constant 0 : index
      %13 = vector.load %arg5[%c0_11, %c0_12] : memref<8x128xf32, #tpu.memory_space<vmem>>, vector<8x128xf32>
      tpu.vector_store %arg5[%c0_11, %c0_12], %12 {strides = array<i32>} : memref<8x128xf32, #tpu.memory_space<vmem>>, vector<8x128xf32>,
    } else {
    }
    %c0 = arith.constant 0 : index
    %c0_1 = arith.constant 0 : index
    %3 = vector.load %arg5[%c0, %c0_1] : memref<8x128xf32, #tpu.memory_space<vmem>>, vector<8x128xf32>
    %c0_2 = arith.constant 0 : index
    %c0_3 = arith.constant 0 : index
    %4 = vector.load %arg3[%c0_2, %c0_3] : memref<8x32xf32, #tpu.memory_space<vmem>>, vector<8x32xf32>
    %c0_4 = arith.constant 0 : index
    %c0_5 = arith.constant 0 : index
    %5 = vector.load %arg2[%c0_4, %c0_5] : memref<128x32xf32, #tpu.memory_space<vmem>>, vector<128x32xf32>
    %cst = arith.constant dense<0.000000e+00> : vector<8x128xf32>
    %6 = tpu.matmul %4, %5, %cst {dimension_numbers = #tpu.dot_dimension_numbers<[1], [1], [0], [0], [0, 0, 1, 0], [], []>} : vector<8x32xf32>, vector<128x32xf32>, vector<8x128xf32> -> vector<8x128xf32>
    %7 = arith.addf %3, %6 : vector<8x128xf32>
    %c0_6 = arith.constant 0 : index
    %c0_7 = arith.constant 0 : index
    %8 = vector.load %arg5[%c0_6, %c0_7] : memref<8x128xf32, #tpu.memory_space<vmem>>, vector<8x128xf32>
    tpu.vector_store %arg5[%c0_6, %c0_7], %7 {strides = array<i32>} : memref<8x128xf32, #tpu.memory_space<vmem>>, vector<8x128xf32>,
    %c0_i32_8 = arith.constant 0 : i32
    %9 = arith.cmpi eq, %arg1, %c0_i32_8 : i32
    %10 = arith.extui %9 : i1 to i32
    %c0_i32_9 = arith.constant 0 : i32
    %11 = arith.cmpi ne, %10, %c0_i32_9 : i32
    scf.if %11 {
      %c0_10 = arith.constant 0 : index
      %c0_11 = arith.constant 0 : index
      %12 = vector.load %arg5[%c0_10, %c0_11] : memref<8x128xf32, #tpu.memory_space<vmem>>, vector<1x128xf32>
      %c0_12 = arith.constant 0 : index
      %c0_13 = arith.constant 0 : index
      %13 = vector.load %arg4[%c0_12, %c0_13] : memref<1x128xf32, #tpu.memory_space<vmem>>, vector<1x128xf32>
      tpu.vector_store %arg4[%c0_12, %c0_13], %12 {strides = array<i32>} : memref<1x128xf32, #tpu.memory_space<vmem>>, vector<1x128xf32>,
    } else {
    }
    return
  }
  func.func @transform_0(%arg0: i32, %arg1: i32) -> (i32, i32) {
    %c0_i32 = arith.constant 0 : i32
    return %arg0, %arg1 : i32, i32
  }
  func.func @transform_1(%arg0: i32, %arg1: i32) -> (i32, i32) {
    %c0_i32 = arith.constant 0 : i32
    %c0_i32_0 = arith.constant 0 : i32
    return %c0_i32, %arg1 : i32, i32
  }
  func.func @transform_2(%arg0: i32, %arg1: i32) -> (i32, i32) {
    %c0_i32 = arith.constant 0 : i32
    %c0_i32_0 = arith.constant 0 : i32
    return %c0_i32, %arg0 : i32, i32
  }
}

</mosaic_0001>

<llo_original>
// kernel: tpu_custom_call.1
$region0: #{tpu_custom_call.1}
  #allocation0 [shape = 'u32[]', space=smem, size = 0x4, offset = 0x4, fixed_abs, tag = 'smem constant byte address 0x4 - core index']
  #allocation1 [shape = 'u32[144,128]{1,0:T(1,128)}', space=vmem, size = 0x12000, scoped, tag = 'internal scratch']
  #allocation2 [shape = 'f32[8,128]{1,0:T(8,128)}', space=vmem, size = 0x1000, scoped, tag = 'scratch operand']
  %s0 = inlined_call_operand.hbm [shape: f32[8,32], index: 0, kind: input, shape index: {}]
  %s1 = inlined_call_operand.hbm [shape: f32[8,32], index: 1, kind: input, shape index: {}]
  %s2 = inlined_call_operand.hbm [shape: f32[1,128], index: 2, kind: output, shape index: {}]
  %s3 = sld [smem:[#allocation0]]
  $region34: #{tpu_custom_call.1} parent=0
    _
  %s5 = ssub.s32 1, %s3
  %s6 = scalar_select 0, %s5, %s3
  $region1: #{tpu_custom_call.1} parent=0
    #allocation3 [shape = 'u8[65536]{0}', space=vmem, size = 0x10000, scoped, tag = 'input window, operand 0, single buffered']
    #allocation4 [shape = 's32[1]{0}', space=sflag, size = 0x4, scoped, tag = 'scoped memory for tpu_custom_call.1']
    #allocation5 [shape = 's32[1]{0}', space=sflag, size = 0x4, scoped, tag = 'scoped memory for tpu_custom_call.1']
    #allocation6 [shape = 'u8[4096]{0}', space=vmem, size = 0x1000, scoped, tag = 'input window, operand 1, single buffered']
    #allocation7 [shape = 's32[1]{0}', space=sflag, size = 0x4, scoped, tag = 'scoped memory for tpu_custom_call.1']
    #allocation8 [shape = 'u8[512]{0}', space=vmem, size = 0x400, scoped, tag = 'output window, operand 0, single buffered']
    %7 = vsyncpa [#allocation4], 0
    %8 = vsyncpa [#allocation7], 0
    %9 = vsyncpa [#allocation5], 0
    // Predicated region
    $region2: #{tpu_custom_call.1} parent=1 // pred_check
      _
    $region3: #{tpu_custom_call.1} parent=1 // pred_check_branch
      %11 = sbr.rel (0) target = $region5
    $region4: #{tpu_custom_call.1} parent=1 // pred_region
      %s12 = smul.u32 16, %s6
      %s13 = ssub.s32 1, %s12
      %s14 = smul.u32 128, %s13
      %s16 = ssub.s32 2048, %s14
      %17 = vsyncadd [#allocation4], %s16
      %p18 = scmp.ne.s32.totalorder 0, %s14
      %s19 = smul.addr %s12, 128
      %s20 = scalar_lea.hbm %s0, %s19
      %s21 = smul.u32 8, %s13
      %s22 = sshll.u32 [#allocation3], 4
      %s23 = int_to_ptr.vmem [resolvable:$true] %s22
      %s24 = sshll.u32 %s21, 4
      %28 = dma.hbm_to_vmem [thread:$0]  (%p18), %s20, %s24, %s23, [#allocation4], 128, 128, 8
    $region5: #{tpu_custom_call.1} parent=1 // pred_fallthru
      _
    // Predicated region
    $region6: #{tpu_custom_call.1} parent=1 // pred_check
      _
    $region7: #{tpu_custom_call.1} parent=1 // pred_check_branch
      %30 = sbr.rel (0) target = $region9
    $region8: #{tpu_custom_call.1} parent=1 // pred_region
      %s32 = ssub.s32 128, 128
      %33 = vsyncadd [#allocation7], %s32
      %s35 = sshll.u32 [#allocation6], 4
      %s36 = int_to_ptr.vmem [resolvable:$true] %s35
      %38 = dma.hbm_to_vmem [thread:$0]  %s1, 128, %s36, [#allocation7]
    $region9: #{tpu_custom_call.1} parent=1 // pred_fallthru
      _
    // Predicated region
    $region10: #{tpu_custom_call.1} parent=1 // pred_check
      _
    $region11: #{tpu_custom_call.1} parent=1 // pred_check_branch
      %40 = sbr.rel (0) target = $region13
    $region12: #{tpu_custom_call.1} parent=1 // pred_region
      %41 = dma.done [#allocation4], 2048
    $region13: #{tpu_custom_call.1} parent=1 // pred_fallthru
      _
    // Predicated region
    $region14: #{tpu_custom_call.1} parent=1 // pred_check
      _
    $region15: #{tpu_custom_call.1} parent=1 // pred_check_branch
      %43 = sbr.rel (0) target = $region17
    $region16: #{tpu_custom_call.1} parent=1 // pred_region
      %44 = dma.done [#allocation7], 128
    $region17: #{tpu_custom_call.1} parent=1 // pred_fallthru
      _
    %s45 = smul.u32 16, %s6
    %s46 = ssub.s32 1, %s45
    %s47 = smul.u32 128, %s46
    %p48 = scmp.eq.s32.totalorder 0, 0
    // Predicated region
    $region18: #{tpu_custom_call.1} parent=1 // pred_check
      %p49 = pneg %p48
    $region19: #{tpu_custom_call.1} parent=1 // pred_check_branch
      %51 = sbr.rel (%p49) target = $region21
    $region20: #{tpu_custom_call.1} parent=1 // pred_region
      %52 = vst [vmem:[#allocation2] sm:$0xff] 0.0
    $region21: #{tpu_custom_call.1} parent=1 // pred_fallthru
      _
    %v53 = vld [vmem:[#allocation2] sm:$0xff]
    %v54 = vld [vmem:[#allocation6] sm:$0xff]
    %v55 = vld [vmem:[#allocation3] sm:$0xff]
    %v56 = vld [vmem:[#allocation3 + $0x8] sm:$0xff]
    %v57 = vld [vmem:[#allocation3 + $0x10] sm:$0xff]
    %v58 = vld [vmem:[#allocation3 + $0x18] sm:$0xff]
    %v59 = vld [vmem:[#allocation3 + $0x20] sm:$0xff]
    %v60 = vld [vmem:[#allocation3 + $0x28] sm:$0xff]
    %v61 = vld [vmem:[#allocation3 + $0x30] sm:$0xff]
    %v62 = vld [vmem:[#allocation3 + $0x38] sm:$0xff]
    %v63 = vld [vmem:[#allocation3 + $0x40] sm:$0xff]
    %v64 = vld [vmem:[#allocation3 + $0x48] sm:$0xff]
    %v65 = vld [vmem:[#allocation3 + $0x50] sm:$0xff]
    %v66 = vld [vmem:[#allocation3 + $0x58] sm:$0xff]
    %v67 = vld [vmem:[#allocation3 + $0x60] sm:$0xff]
    %v68 = vld [vmem:[#allocation3 + $0x68] sm:$0xff]
    %v69 = vld [vmem:[#allocation3 + $0x70] sm:$0xff]
    %v70 = vld [vmem:[#allocation3 + $0x78] sm:$0xff]
    %vm71 = vcmask 261120
    %v73 = vsel %vm71, %v54, 0
    %v76 = vsel %vm71, %v55, 0
    %v79 = vsel %vm71, %v56, 0
    %v82 = vsel %vm71, %v57, 0
    %v85 = vsel %vm71, %v58, 0
    %v88 = vsel %vm71, %v59, 0
    %v91 = vsel %vm71, %v60, 0
    %v94 = vsel %vm71, %v61, 0
    %v97 = vsel %vm71, %v62, 0
    %v100 = vsel %vm71, %v63, 0
    %v103 = vsel %vm71, %v64, 0
    %v106 = vsel %vm71, %v65, 0
    %v109 = vsel %vm71, %v66, 0
    %v112 = vsel %vm71, %v67, 0
    %v115 = vsel %vm71, %v68, 0
    %v118 = vsel %vm71, %v69, 0
    %v121 = vsel %vm71, %v70, 0
    %123 = vmatprep.subr.mxu0 0.0
    %124 = vmatpush1.xpose.msra.mxu0 %v76
    %125 = vmatprep.subr.mxu0 0.0
    %126 = vmatpush1.xpose.msra.mxu0 %v79
    %127 = vmatprep.subr.mxu0 0.0
    %128 = vmatpush1.xpose.msra.mxu0 %v82
    %129 = vmatprep.subr.mxu0 0.0
    %130 = vmatpush1.xpose.msra.mxu0 %v85
    %131 = vmatprep.subr.mxu0 0.0
    %132 = vmatpush1.xpose.msra.mxu0 %v88
    %133 = vmatprep.subr.mxu0 0.0
    %134 = vmatpush1.xpose.msra.mxu0 %v91
    %135 = vmatprep.subr.mxu0 0.0
    %136 = vmatpush1.xpose.msra.mxu0 %v94
    %137 = vmatprep.subr.mxu0 0.0
    %138 = vmatpush1.xpose.msra.mxu0 %v97
    %139 = vmatprep.subr.mxu0 0.0
    %140 = vmatpush1.xpose.msra.mxu0 %v100
    %141 = vmatprep.subr.mxu0 0.0
    %142 = vmatpush1.xpose.msra.mxu0 %v103
    %143 = vmatprep.subr.mxu0 0.0
    %144 = vmatpush1.xpose.msra.mxu0 %v106
    %145 = vmatprep.subr.mxu0 0.0
    %146 = vmatpush1.xpose.msra.mxu0 %v109
    %147 = vmatprep.subr.mxu0 0.0
    %148 = vmatpush1.xpose.msra.mxu0 %v112
    %149 = vmatprep.subr.mxu0 0.0
    %150 = vmatpush1.xpose.msra.mxu0 %v115
    %151 = vmatprep.subr.mxu0 0.0
    %152 = vmatpush1.xpose.msra.mxu0 %v118
    %153 = vmatprep.subr.mxu0 0.0
    %154 = vmatpush1.xpose.msra.mxu0 %v121
    %155 = vmatprep.subr.mxu0 0.0
    %156 = vmatpush1.xpose.msra.mxu0 0.0
    %157 = vmatprep.subr.mxu0 0.0
    %158 = vmatpush1.xpose.msra.mxu0 0.0
    %159 = vmatprep.subr.mxu0 0.0
    %160 = vmatpush1.xpose.msra.mxu0 0.0
    %161 = vmatprep.subr.mxu0 0.0
    %162 = vmatpush1.xpose.msra.mxu0 0.0
    %163 = vmatprep.subr.mxu0 0.0
    %164 = vmatpush1.xpose.msra.mxu0 0.0
    %165 = vmatprep.subr.mxu0 0.0
    %166 = vmatpush1.xpose.msra.mxu0 0.0
    %167 = vmatprep.subr.mxu0 0.0
    %168 = vmatpush1.xpose.msra.mxu0 0.0
    %169 = vmatprep.subr.mxu0 0.0
    %170 = vmatpush1.xpose.msra.mxu0 0.0
    %171 = vmatprep.subr.mxu0 0.0
    %172 = vmatpush1.xpose.msra.mxu0 0.0
    %173 = vmatprep.subr.mxu0 0.0
    %174 = vmatpush1.xpose.msra.mxu0 0.0
    %175 = vmatprep.subr.mxu0 0.0
    %176 = vmatpush1.xpose.msra.mxu0 0.0
    %177 = vmatprep.subr.mxu0 0.0
    %178 = vmatpush1.xpose.msra.mxu0 0.0
    %179 = vmatprep.subr.mxu0 0.0
    %180 = vmatpush1.xpose.msra.mxu0 0.0
    %181 = vmatprep.subr.mxu0 0.0
    %182 = vmatpush1.xpose.msra.mxu0 0.0
    %183 = vmatprep.subr.mxu0 0.0
    %184 = vmatpush1.xpose.msra.mxu0 0.0
    %185 = vmatprep.subr.mxu0 0.0
    %186 = vmatpush1.xpose.msra.mxu0 0.0
    %187 = vmatprep.mubr.f32.mxu0 0.0
    %188 = vmatmul.mubr.f32.gmra.mrb[0].mxu0 %v73
    %v189 = vpop.f32.mrb[0].mxu0
    %v190 = vadd.f32 0.0, %v189
    %v191 = vpop.f32.mrb[0].mxu0
    %192 = vdwg.mxu0
    %v193 = vadd.f32 %v53, %v190
    %194 = vst [vmem:[#allocation2] sm:$0xff] %v193
    // Predicated region
    $region22: #{tpu_custom_call.1} parent=1 // pred_check
      %p195 = pneg %p48
    $region23: #{tpu_custom_call.1} parent=1 // pred_check_branch
      %197 = sbr.rel (%p195) target = $region25
    $region24: #{tpu_custom_call.1} parent=1 // pred_region
      %v198 = vld [vmem:[#allocation2] sm:$0x1]
      %199 = vst [vmem:[#allocation8] sm:$0x1] %v198
    $region25: #{tpu_custom_call.1} parent=1 // pred_fallthru
      _
    // Predicated region
    $region26: #{tpu_custom_call.1} parent=1 // pred_check
      _
    $region27: #{tpu_custom_call.1} parent=1 // pred_check_branch
      %201 = sbr.rel (0) target = $region29
    $region28: #{tpu_custom_call.1} parent=1 // pred_region
      %s203 = ssub.s32 16, 16
      %204 = vsyncadd [#allocation5], %s203
      %s205 = smul.addr %s6, 16
      %s206 = scalar_lea.hbm %s2, %s205
      %s208 = sshll.u32 [#allocation8], 4
      %s209 = int_to_ptr.vmem [resolvable:$true] %s208
      %211 = dma.vmem_to_hbm [thread:$0]  %s209, 16, %s206, [#allocation5]
    $region29: #{tpu_custom_call.1} parent=1 // pred_fallthru
      _
    // Predicated region
    $region30: #{tpu_custom_call.1} parent=1 // pred_check
      _
    $region31: #{tpu_custom_call.1} parent=1 // pred_check_branch
      %213 = sbr.rel (0) target = $region33
    $region32: #{tpu_custom_call.1} parent=1 // pred_region
      %214 = dma.done [#allocation5], 16
    $region33: #{tpu_custom_call.1} parent=1 // pred_fallthru
      _
    %215 = vsyncpa [#allocation4], 1
    %216 = vsyncpa [#allocation7], 1
    %217 = vsyncpa [#allocation5], 1

// kernel: tpu_custom_call.1
$region0: #{tpu_custom_call.1}
  #allocation0 [shape = 'u32[]', space=smem, size = 0x4, offset = 0x4, fixed_abs, tag = 'smem constant byte address 0x4 - core index']
  #allocation1 [shape = 'u32[144,128]{1,0:T(1,128)}', space=vmem, size = 0x12000, scoped, tag = 'internal scratch']
  #allocation2 [shape = 'f32[8,128]{1,0:T(8,128)}', space=vmem, size = 0x1000, scoped, tag = 'scratch operand']
  %s0 = inlined_call_operand.hbm [shape: f32[8,32], index: 0, kind: input, shape index: {}]
  %s1 = inlined_call_operand.hbm [shape: f32[8,32], index: 1, kind: input, shape index: {}]
  %s2 = inlined_call_operand.hbm [shape: f32[1,128], index: 2, kind: output, shape index: {}]
  %s3 = sld [smem:[#allocation0]]
  $region34: #{tpu_custom_call.1} parent=0
    _
  %s5 = ssub.s32 1, %s3
  %s6 = scalar_select 0, %s5, %s3
  $region1: #{tpu_custom_call.1} parent=0
    #allocation3 [shape = 'u8[65536]{0}', space=vmem, size = 0x10000, scoped, tag = 'input window, operand 0, single buffered']
    #allocation4 [shape = 's32[1]{0}', space=sflag, size = 0x4, scoped, tag = 'scoped memory for tpu_custom_call.1']
    #allocation5 [shape = 's32[1]{0}', space=sflag, size = 0x4, scoped, tag = 'scoped memory for tpu_custom_call.1']
    #allocation6 [shape = 'u8[4096]{0}', space=vmem, size = 0x1000, scoped, tag = 'input window, operand 1, single buffered']
    #allocation7 [shape = 's32[1]{0}', space=sflag, size = 0x4, scoped, tag = 'scoped memory for tpu_custom_call.1']
    #allocation8 [shape = 'u8[512]{0}', space=vmem, size = 0x400, scoped, tag = 'output window, operand 0, single buffered']
    %7 = vsyncpa [#allocation4], 0
    %8 = vsyncpa [#allocation7], 0
    %9 = vsyncpa [#allocation5], 0
    // Predicated region
    $region2: #{tpu_custom_call.1} parent=1 // pred_check
      _
    $region3: #{tpu_custom_call.1} parent=1 // pred_check_branch
      %11 = sbr.rel (0) target = $region5
    $region4: #{tpu_custom_call.1} parent=1 // pred_region
      %s13 = ssub.s32 2048, 128
      %14 = vsyncadd [#allocation4], %s13
      %s15 = sshll.u32 [#allocation3], 4
      %s16 = int_to_ptr.vmem [resolvable:$true] %s15
      %21 = dma.hbm_to_vmem [thread:$0]  %s0, 128, %s16, [#allocation4], 128, 128, 8
    $region5: #{tpu_custom_call.1} parent=1 // pred_fallthru
      _
    // Predicated region
    $region6: #{tpu_custom_call.1} parent=1 // pred_check
      _
    $region7: #{tpu_custom_call.1} parent=1 // pred_check_branch
      %23 = sbr.rel (0) target = $region9
    $region8: #{tpu_custom_call.1} parent=1 // pred_region
      %s25 = ssub.s32 128, 128
      %26 = vsyncadd [#allocation7], %s25
      %s28 = sshll.u32 [#allocation6], 4
      %s29 = int_to_ptr.vmem [resolvable:$true] %s28
      %31 = dma.hbm_to_vmem [thread:$0]  %s1, 128, %s29, [#allocation7]
    $region9: #{tpu_custom_call.1} parent=1 // pred_fallthru
      _
    // Predicated region
    $region10: #{tpu_custom_call.1} parent=1 // pred_check
      _
    $region11: #{tpu_custom_call.1} parent=1 // pred_check_branch
      %33 = sbr.rel (0) target = $region13
    $region12: #{tpu_custom_call.1} parent=1 // pred_region
      %34 = dma.done [#allocation4], 2048
    $region13: #{tpu_custom_call.1} parent=1 // pred_fallthru
      _
    // Predicated region
    $region14: #{tpu_custom_call.1} parent=1 // pred_check
      _
    $region15: #{tpu_custom_call.1} parent=1 // pred_check_branch
      %36 = sbr.rel (0) target = $region17
    $region16: #{tpu_custom_call.1} parent=1 // pred_region
      %37 = dma.done [#allocation7], 128
    $region17: #{tpu_custom_call.1} parent=1 // pred_fallthru
      _
    %p38 = scmp.eq.s32.totalorder 0, 0
    // Predicated region
    $region18: #{tpu_custom_call.1} parent=1 // pred_check
      %p39 = pneg %p38
    $region19: #{tpu_custom_call.1} parent=1 // pred_check_branch
      %41 = sbr.rel (%p39) target = $region21
    $region20: #{tpu_custom_call.1} parent=1 // pred_region
      %42 = vst [vmem:[#allocation2] sm:$0xff] 0.0
    $region21: #{tpu_custom_call.1} parent=1 // pred_fallthru
      _
    %v43 = vld [vmem:[#allocation2] sm:$0xff]
    %v44 = vld [vmem:[#allocation6] sm:$0xff]
    %v45 = vld [vmem:[#allocation3] sm:$0xff]
    %v46 = vld [vmem:[#allocation3 + $0x8] sm:$0xff]
    %v47 = vld [vmem:[#allocation3 + $0x10] sm:$0xff]
    %v48 = vld [vmem:[#allocation3 + $0x18] sm:$0xff]
    %v49 = vld [vmem:[#allocation3 + $0x20] sm:$0xff]
    %v50 = vld [vmem:[#allocation3 + $0x28] sm:$0xff]
    %v51 = vld [vmem:[#allocation3 + $0x30] sm:$0xff]
    %v52 = vld [vmem:[#allocation3 + $0x38] sm:$0xff]
    %v53 = vld [vmem:[#allocation3 + $0x40] sm:$0xff]
    %v54 = vld [vmem:[#allocation3 + $0x48] sm:$0xff]
    %v55 = vld [vmem:[#allocation3 + $0x50] sm:$0xff]
    %v56 = vld [vmem:[#allocation3 + $0x58] sm:$0xff]
    %v57 = vld [vmem:[#allocation3 + $0x60] sm:$0xff]
    %v58 = vld [vmem:[#allocation3 + $0x68] sm:$0xff]
    %v59 = vld [vmem:[#allocation3 + $0x70] sm:$0xff]
    %v60 = vld [vmem:[#allocation3 + $0x78] sm:$0xff]
    %vm61 = vcmask 261120
    %v63 = vsel %vm61, %v44, 0
    %v66 = vsel %vm61, %v45, 0
    %v69 = vsel %vm61, %v46, 0
    %v72 = vsel %vm61, %v47, 0
    %v75 = vsel %vm61, %v48, 0
    %v78 = vsel %vm61, %v49, 0
    %v81 = vsel %vm61, %v50, 0
    %v84 = vsel %vm61, %v51, 0
    %v87 = vsel %vm61, %v52, 0
    %v90 = vsel %vm61, %v53, 0
    %v93 = vsel %vm61, %v54, 0
    %v96 = vsel %vm61, %v55, 0
    %v99 = vsel %vm61, %v56, 0
    %v102 = vsel %vm61, %v57, 0
    %v105 = vsel %vm61, %v58, 0
    %v108 = vsel %vm61, %v59, 0
    %v111 = vsel %vm61, %v60, 0
    %113 = vmatprep.subr.mxu0 0.0
    %114 = vmatpush1.xpose.msra.mxu0 %v66
    %115 = vmatprep.subr.mxu0 0.0
    %116 = vmatpush1.xpose.msra.mxu0 %v69
    %117 = vmatprep.subr.mxu0 0.0
    %118 = vmatpush1.xpose.msra.mxu0 %v72
    %119 = vmatprep.subr.mxu0 0.0
    %120 = vmatpush1.xpose.msra.mxu0 %v75
    %121 = vmatprep.subr.mxu0 0.0
    %122 = vmatpush1.xpose.msra.mxu0 %v78
    %123 = vmatprep.subr.mxu0 0.0
    %124 = vmatpush1.xpose.msra.mxu0 %v81
    %125 = vmatprep.subr.mxu0 0.0
    %126 = vmatpush1.xpose.msra.mxu0 %v84
    %127 = vmatprep.subr.mxu0 0.0
    %128 = vmatpush1.xpose.msra.mxu0 %v87
    %129 = vmatprep.subr.mxu0 0.0
    %130 = vmatpush1.xpose.msra.mxu0 %v90
    %131 = vmatprep.subr.mxu0 0.0
    %132 = vmatpush1.xpose.msra.mxu0 %v93
    %133 = vmatprep.subr.mxu0 0.0
    %134 = vmatpush1.xpose.msra.mxu0 %v96
    %135 = vmatprep.subr.mxu0 0.0
    %136 = vmatpush1.xpose.msra.mxu0 %v99
    %137 = vmatprep.subr.mxu0 0.0
    %138 = vmatpush1.xpose.msra.mxu0 %v102
    %139 = vmatprep.subr.mxu0 0.0
    %140 = vmatpush1.xpose.msra.mxu0 %v105
    %141 = vmatprep.subr.mxu0 0.0
    %142 = vmatpush1.xpose.msra.mxu0 %v108
    %143 = vmatprep.subr.mxu0 0.0
    %144 = vmatpush1.xpose.msra.mxu0 %v111
    %145 = vmatprep.subr.mxu0 0.0
    %146 = vmatpush1.xpose.msra.mxu0 0.0
    %147 = vmatprep.subr.mxu0 0.0
    %148 = vmatpush1.xpose.msra.mxu0 0.0
    %149 = vmatprep.subr.mxu0 0.0
    %150 = vmatpush1.xpose.msra.mxu0 0.0
    %151 = vmatprep.subr.mxu0 0.0
    %152 = vmatpush1.xpose.msra.mxu0 0.0
    %153 = vmatprep.subr.mxu0 0.0
    %154 = vmatpush1.xpose.msra.mxu0 0.0
    %155 = vmatprep.subr.mxu0 0.0
    %156 = vmatpush1.xpose.msra.mxu0 0.0
    %157 = vmatprep.subr.mxu0 0.0
    %158 = vmatpush1.xpose.msra.mxu0 0.0
    %159 = vmatprep.subr.mxu0 0.0
    %160 = vmatpush1.xpose.msra.mxu0 0.0
    %161 = vmatprep.subr.mxu0 0.0
    %162 = vmatpush1.xpose.msra.mxu0 0.0
    %163 = vmatprep.subr.mxu0 0.0
    %164 = vmatpush1.xpose.msra.mxu0 0.0
    %165 = vmatprep.subr.mxu0 0.0
    %166 = vmatpush1.xpose.msra.mxu0 0.0
    %167 = vmatprep.subr.mxu0 0.0
    %168 = vmatpush1.xpose.msra.mxu0 0.0
    %169 = vmatprep.subr.mxu0 0.0
    %170 = vmatpush1.xpose.msra.mxu0 0.0
    %171 = vmatprep.subr.mxu0 0.0
    %172 = vmatpush1.xpose.msra.mxu0 0.0
    %173 = vmatprep.subr.mxu0 0.0
    %174 = vmatpush1.xpose.msra.mxu0 0.0
    %175 = vmatprep.subr.mxu0 0.0
    %176 = vmatpush1.xpose.msra.mxu0 0.0
    %177 = vmatprep.mubr.f32.mxu0 0.0
    %178 = vmatmul.mubr.f32.gmra.mrb[0].mxu0 %v63
    %v179 = vpop.f32.mrb[0].mxu0
    %v180 = vadd.f32 0.0, %v179
    %v181 = vpop.f32.mrb[0].mxu0
    %182 = vdwg.mxu0
    %v183 = vadd.f32 %v43, %v180
    %184 = vst [vmem:[#allocation2] sm:$0xff] %v183
    // Predicated region
    $region22: #{tpu_custom_call.1} parent=1 // pred_check
      %p185 = pneg %p38
    $region23: #{tpu_custom_call.1} parent=1 // pred_check_branch
      %187 = sbr.rel (%p185) target = $region25
    $region24: #{tpu_custom_call.1} parent=1 // pred_region
      %v188 = vld [vmem:[#allocation2] sm:$0x1]
      %189 = vst [vmem:[#allocation8] sm:$0x1] %v188
    $region25: #{tpu_custom_call.1} parent=1 // pred_fallthru
      _
    // Predicated region
    $region26: #{tpu_custom_call.1} parent=1 // pred_check
      _
    $region27: #{tpu_custom_call.1} parent=1 // pred_check_branch
      %191 = sbr.rel (0) target = $region29
    $region28: #{tpu_custom_call.1} parent=1 // pred_region
      %s193 = ssub.s32 16, 16
      %194 = vsyncadd [#allocation5], %s193
      %s196 = sshll.u32 [#allocation8], 4
      %s197 = int_to_ptr.vmem [resolvable:$true] %s196
      %199 = dma.vmem_to_hbm [thread:$0]  %s197, 16, %s2, [#allocation5]
    $region29: #{tpu_custom_call.1} parent=1 // pred_fallthru
      _
    // Predicated region
    $region30: #{tpu_custom_call.1} parent=1 // pred_check
      _
    $region31: #{tpu_custom_call.1} parent=1 // pred_check_branch
      %201 = sbr.rel (0) target = $region33
    $region32: #{tpu_custom_call.1} parent=1 // pred_region
      %202 = dma.done [#allocation5], 16
    $region33: #{tpu_custom_call.1} parent=1 // pred_fallthru
      _
    %203 = vsyncpa [#allocation4], 1
    %204 = vsyncpa [#allocation7], 1
    %205 = vsyncpa [#allocation5], 1

</llo_original>
